<compile_context>
chip_gen: v6e
topology: v6e:2x2x1
jax: 0.10.0
libtpu: 0.0.40
codegen_flags: <defaults>
</compile_context>

<pallas_src>
import jax
import jax.numpy as jnp
from jax.experimental import pallas as pl
from jax.experimental.pallas import tpu as pltpu


_LANE = 128  # (8,128) tiling pads the D=64 lane axis to 128 for f32/bf16.


def ws_readout_kernel(seq_ref, q_ref, out_ref, m_sc, l_sc, acc_sc):
    # seq_ref: (BB, BN, D), q_ref: (BB, D), out_ref: (BB, D)
    # scratches: m_sc/l_sc (BB, 1) f32, acc_sc (BB, D) f32
    k = pl.program_id(1)

    @pl.when(k == 0)
    def _init():
        m_sc[...] = jnp.full_like(m_sc, -jnp.inf)
        l_sc[...] = jnp.zeros_like(l_sc)
        acc_sc[...] = jnp.zeros_like(acc_sc)

    seq = seq_ref[...].astype(jnp.float32)               # (BB, BN, D)
    q = q_ref[...].astype(jnp.float32)                   # (BB, D)

    # Similarity on the VPU/XLU: broadcast-multiply + lane-axis (D) reduce.
    sim = jnp.sum(seq * q[:, None, :], axis=-1)          # (BB, BN) f32

    # Online (flash-style) softmax over the N axis; exact when nk == 1.
    m_prev = m_sc[...]                                    # (BB, 1)
    m_new = jnp.maximum(m_prev, jnp.max(sim, axis=-1, keepdims=True))
    alpha = jnp.exp(m_prev - m_new)                       # (BB, 1)
    p = jnp.exp(sim - m_new)                              # (BB, BN)

    l_sc[...] = alpha * l_sc[...] + jnp.sum(p, axis=-1, keepdims=True)
    # Weighted readout on the VPU/XLU: broadcast-multiply + sublane-axis (N)
    # reduce, accumulated in f32 (no per-batch MXU weight reloads).
    acc_sc[...] = alpha * acc_sc[...] + jnp.sum(seq * p[..., None], axis=1)
    m_sc[...] = m_new

    @pl.when(k == pl.num_programs(1) - 1)
    def _finalize():
        inv_l = pl.reciprocal(l_sc[...], approx=True)     # EUP slot; denom >= 1
        out_ref[...] = (acc_sc[...] * inv_l).astype(out_ref.dtype)


def _vmem_budget_and_limit():
    """Generation-aware soft VMEM budget + hard vmem_limit_bytes."""
    phys = 0
    try:
        phys = int(pltpu.get_tpu_info().vmem_capacity_bytes)
    except Exception:  # pragma: no cover - defensive; fall back to smallest gen
        phys = 0
    if phys >= 100 * 1024 * 1024:            # v5e / v6e: 128 MiB physical
        return 48 * 1024 * 1024, 64 * 1024 * 1024
    # v7x (64 MiB physical, 32 MiB scoped default) or unknown: stay small.
    return 20 * 1024 * 1024, 28 * 1024 * 1024


def _per_row_vmem_bytes(block_n, itemsize):
    # One batch row of a (block_b, block_n, 64) seq block costs:
    #   * 2x double-buffered input DMA slab, lane-padded 64 -> 128
    #   * ~2 f32 working copies inside the kernel (f32 upcast + one temp)
    return block_n * _LANE * (2 * itemsize + 2 * 4)


def _choose_blocks(B, N, itemsize, budget_bytes):
    """Pick (block_b, block_n): batch block (multiple of 8) and N tile."""
    b8 = ((B + 7) // 8) * 8

    # Preferred: full-N blocks (single-pass exact softmax), batch-blocked.
    bb = (budget_bytes // _per_row_vmem_bytes(N, itemsize)) // 8 * 8
    if bb >= 8:
        block_b = min(int(bb), b8)
        # Keep the pipeline fed: aim for >= ~8 grid steps (>= 3-4 per core on
        # v7x's two TensorCores) whenever the batch is large enough.
        target_steps = 8
        if b8 >= target_steps * 8:
            block_b = min(block_b, max(8, (pl.cdiv(b8, target_steps) // 8) * 8))
        return block_b, N

    # Large-N fallback: tile N with the flash-style online softmax.
    block_b = 8
    max_bn = (budget_bytes // (block_b * _per_row_vmem_bytes(1, itemsize))) // 8 * 8
    max_bn = max(8, int(max_bn))
    best = 0
    d = 8
    while d <= min(max_bn, N):
        if N % d == 0:                       # divisor of N -> no ragged softmax tile
            best = d
        d += 8
    if best == 0:
        # TODO(synk): ragged-N tiles would need in-kernel masking of the
        # softmax axis; fall back to a full-N block (may exceed the soft budget).
        return block_b, N
    return block_b, best


def ws_readout(seq, query, *, block_b=None, block_n=None):
    """seq: (B, N, D), query: (B, 1, D) -> (B, D)."""
    B, N, D = seq.shape
    assert query.shape == (B, 1, D)
    assert D == 64, "WSReadout hard-codes feature dim 64 via sim.repeat(1, 1, 64)"

    itemsize = jnp.dtype(seq.dtype).itemsize
    budget, vmem_limit = _vmem_budget_and_limit()
    auto_bb, auto_bn = _choose_blocks(B, N, itemsize, budget)
    block_b = auto_bb if block_b is None else int(block_b)
    block_n = auto_bn if block_n is None else int(block_n)
    assert block_b % 8 == 0 or block_b == B
    assert N % block_n == 0, "block_n must divide N (no ragged softmax tiles)"

    q2d = query.reshape(B, D)                 # sublane-dense query slab, no copy

    grid = (pl.cdiv(B, block_b), N // block_n)

    out = pl.pallas_call(
        ws_readout_kernel,
        out_shape=jax.ShapeDtypeStruct((B, D), seq.dtype),
        grid_spec=pltpu.PrefetchScalarGridSpec(
            num_scalar_prefetch=0,
            grid=grid,
            in_specs=[
                pl.BlockSpec((block_b, block_n, D), lambda b, k: (b, k, 0)),
                pl.BlockSpec((block_b, D), lambda b, k: (b, 0)),
            ],
            out_specs=pl.BlockSpec((block_b, D), lambda b, k: (b, 0)),
            scratch_shapes=[
                pltpu.VMEM((block_b, 1), jnp.float32),   # running max
                pltpu.VMEM((block_b, 1), jnp.float32),   # running denom
                pltpu.VMEM((block_b, D), jnp.float32),   # f32 accumulator
            ],
        ),
        compiler_params=pltpu.CompilerParams(
            dimension_semantics=("parallel", "arbitrary"),
            vmem_limit_bytes=vmem_limit,
        ),
    )(seq, q2d)
    return out


def ws_readout_ref(seq, query):
    # Pure-JAX reference mirroring the PyTorch forward.
    q = jnp.transpose(query, (0, 2, 1))                 # (B, D, 1)
    sim = jnp.matmul(seq, q)                            # (B, N, 1)
    sim = jax.nn.softmax(sim, axis=1)                   # softmax over N
    sim = jnp.tile(sim, (1, 1, seq.shape[-1]))          # repeat(1, 1, 64)
    out = jnp.sum(seq * sim, axis=1)                    # (B, D)
    return out


if __name__ == "__main__":
    # Small deterministic shapes; D must be 64 per the module.
    B, N, D = 4, 16, 64
    key = jax.random.PRNGKey(0)
    k_seq, k_q = jax.random.split(key)
    seq = jax.random.normal(k_seq, (B, N, D), dtype=jnp.float32)
    query = jax.random.normal(k_q, (B, 1, D), dtype=jnp.float32)

    out = jax.block_until_ready(ws_readout(seq, query))
    ref = ws_readout_ref(seq, query)
    assert out.shape == (B, D)
    assert jnp.allclose(out, ref, atol=2e-3, rtol=2e-3), "mismatch vs reference"

    # Ragged batch (B not a multiple of the 8-row block): masked edge blocks,
    # no wrapper-side padding copy.
    out2 = jax.block_until_ready(ws_readout(seq[:3], query[:3]))
    ref2 = ws_readout_ref(seq[:3], query[:3])
    assert out2.shape == (3, D)
    assert jnp.allclose(out2, ref2, atol=2e-3, rtol=2e-3), "ragged-batch mismatch"

    # Force the N-tiled (flash-style online softmax) large-N fallback path.
    out3 = jax.block_until_ready(ws_readout(seq, query, block_b=8, block_n=8))
    assert jnp.allclose(out3, ref, atol=2e-3, rtol=2e-3), "N-tiled path mismatch"

    print("KERNEL_OK")
</pallas_src>

<mosaic_0001>
module attributes {stable_mosaic.version = 11 : i64} {
  func.func @ws_readout_kernel(%arg0: i32, %arg1: i32, %arg2: memref<8x16x64xf32, #tpu.memory_space<vmem>>, %arg3: memref<8x64xf32, #tpu.memory_space<vmem>>, %arg4: memref<8x64xf32, #tpu.memory_space<vmem>>, %arg5: memref<8x1xf32, #tpu.memory_space<vmem>>, %arg6: memref<8x1xf32, #tpu.memory_space<vmem>>, %arg7: memref<8x64xf32, #tpu.memory_space<vmem>>) attributes {dimension_semantics = [#tpu.dimension_semantics<parallel>, #tpu.dimension_semantics<arbitrary>], iteration_bounds = array<i64: 1, 1>, scalar_prefetch = 0 : i64, scratch_operands = 3 : i64, tpu.core_type = #tpu.core_type<tc>, window_params = [{transform_indices = @transform_0, window_bounds = array<i64: 8, 16, 64>}, {transform_indices = @transform_1, window_bounds = array<i64: 8, 64>}, {transform_indices = @transform_2, window_bounds = array<i64: 8, 64>}]} {
    %c0_i32 = arith.constant 0 : i32
    %0 = arith.cmpi eq, %arg1, %c0_i32 : i32
    %1 = arith.extui %0 : i1 to i32
    %c0_i32_0 = arith.constant 0 : i32
    %2 = arith.cmpi ne, %1, %c0_i32_0 : i32
    scf.if %2 {
      %cst_22 = arith.constant 0xFF800000 : f32
      %37 = vector.broadcast %cst_22 : f32 to vector<8x1xf32>
      %c0_23 = arith.constant 0 : index
      %c0_24 = arith.constant 0 : index
      %38 = vector.load %arg5[%c0_23, %c0_24] : memref<8x1xf32, #tpu.memory_space<vmem>>, vector<8x1xf32>
      tpu.vector_store %arg5[%c0_23, %c0_24], %37 {strides = array<i32>} : memref<8x1xf32, #tpu.memory_space<vmem>>, vector<8x1xf32>,
      %cst_25 = arith.constant 0.000000e+00 : f32
      %39 = vector.broadcast %cst_25 : f32 to vector<8x1xf32>
      %c0_26 = arith.constant 0 : index
      %c0_27 = arith.constant 0 : index
      %40 = vector.load %arg6[%c0_26, %c0_27] : memref<8x1xf32, #tpu.memory_space<vmem>>, vector<8x1xf32>
      tpu.vector_store %arg6[%c0_26, %c0_27], %39 {strides = array<i32>} : memref<8x1xf32, #tpu.memory_space<vmem>>, vector<8x1xf32>,
      %cst_28 = arith.constant 0.000000e+00 : f32
      %41 = vector.broadcast %cst_28 : f32 to vector<8x64xf32>
      %c0_29 = arith.constant 0 : index
      %c0_30 = arith.constant 0 : index
      %42 = vector.load %arg7[%c0_29, %c0_30] : memref<8x64xf32, #tpu.memory_space<vmem>>, vector<8x64xf32>
      tpu.vector_store %arg7[%c0_29, %c0_30], %41 {strides = array<i32>} : memref<8x64xf32, #tpu.memory_space<vmem>>, vector<8x64xf32>,
    } else {
    }
    %c0 = arith.constant 0 : index
    %c0_1 = arith.constant 0 : index
    %c0_2 = arith.constant 0 : index
    %3 = vector.load %arg2[%c0, %c0_1, %c0_2] : memref<8x16x64xf32, #tpu.memory_space<vmem>>, vector<8x16x64xf32>
    %c0_3 = arith.constant 0 : index
    %c0_4 = arith.constant 0 : index
    %4 = vector.load %arg3[%c0_3, %c0_4] : memref<8x64xf32, #tpu.memory_space<vmem>>, vector<8x64xf32>
    %5 = vector.shape_cast %4 : vector<8x64xf32> to vector<8x1x64xf32>
    %6 = vector.broadcast %5 : vector<8x1x64xf32> to vector<8x16x64xf32>
    %7 = arith.mulf %3, %6 : vector<8x16x64xf32>
    %cst = arith.constant dense<0.000000e+00> : vector<8x16xf32>
    %8 = vector.multi_reduction <add>, %7, %cst [2] : vector<8x16x64xf32> to vector<8x16xf32>
    %c0_5 = arith.constant 0 : index
    %c0_6 = arith.constant 0 : index
    %9 = vector.load %arg5[%c0_5, %c0_6] : memref<8x1xf32, #tpu.memory_space<vmem>>, vector<8x1xf32>
    %cst_7 = arith.constant dense<0xFF800000> : vector<8xf32>
    %10 = vector.multi_reduction <maximumf>, %8, %cst_7 [1] : vector<8x16xf32> to vector<8xf32>
    %11 = vector.shape_cast %10 : vector<8xf32> to vector<8x1xf32>
    %12 = arith.maximumf %9, %11 : vector<8x1xf32>
    %13 = arith.subf %9, %12 : vector<8x1xf32>
    %14 = math.exp %13 : vector<8x1xf32>
    %15 = vector.broadcast %12 : vector<8x1xf32> to vector<8x16xf32>
    %16 = arith.subf %8, %15 : vector<8x16xf32>
    %17 = math.exp %16 : vector<8x16xf32>
    %c0_8 = arith.constant 0 : index
    %c0_9 = arith.constant 0 : index
    %18 = vector.load %arg6[%c0_8, %c0_9] : memref<8x1xf32, #tpu.memory_space<vmem>>, vector<8x1xf32>
    %19 = arith.mulf %14, %18 : vector<8x1xf32>
    %cst_10 = arith.constant dense<0.000000e+00> : vector<8xf32>
    %20 = vector.multi_reduction <add>, %17, %cst_10 [1] : vector<8x16xf32> to vector<8xf32>
    %21 = vector.shape_cast %20 : vector<8xf32> to vector<8x1xf32>
    %22 = arith.addf %19, %21 : vector<8x1xf32>
    %c0_11 = arith.constant 0 : index
    %c0_12 = arith.constant 0 : index
    %23 = vector.load %arg6[%c0_11, %c0_12] : memref<8x1xf32, #tpu.memory_space<vmem>>, vector<8x1xf32>
    tpu.vector_store %arg6[%c0_11, %c0_12], %22 {strides = array<i32>} : memref<8x1xf32, #tpu.memory_space<vmem>>, vector<8x1xf32>,
    %c0_13 = arith.constant 0 : index
    %c0_14 = arith.constant 0 : index
    %24 = vector.load %arg7[%c0_13, %c0_14] : memref<8x64xf32, #tpu.memory_space<vmem>>, vector<8x64xf32>
    %25 = vector.broadcast %14 : vector<8x1xf32> to vector<8x64xf32>
    %26 = arith.mulf %25, %24 : vector<8x64xf32>
    %27 = vector.shape_cast %17 : vector<8x16xf32> to vector<8x16x1xf32>
    %28 = vector.broadcast %27 : vector<8x16x1xf32> to vector<8x16x64xf32>
    %29 = arith.mulf %3, %28 : vector<8x16x64xf32>
    %cst_15 = arith.constant dense<0.000000e+00> : vector<8x64xf32>
    %30 = vector.multi_reduction <add>, %29, %cst_15 [1] : vector<8x16x64xf32> to vector<8x64xf32>
    %31 = arith.addf %26, %30 : vector<8x64xf32>
    %c0_16 = arith.constant 0 : index
    %c0_17 = arith.constant 0 : index
    %32 = vector.load %arg7[%c0_16, %c0_17] : memref<8x64xf32, #tpu.memory_space<vmem>>, vector<8x64xf32>
    tpu.vector_store %arg7[%c0_16, %c0_17], %31 {strides = array<i32>} : memref<8x64xf32, #tpu.memory_space<vmem>>, vector<8x64xf32>,
    %c0_18 = arith.constant 0 : index
    %c0_19 = arith.constant 0 : index
    %33 = vector.load %arg5[%c0_18, %c0_19] : memref<8x1xf32, #tpu.memory_space<vmem>>, vector<8x1xf32>
    tpu.vector_store %arg5[%c0_18, %c0_19], %12 {strides = array<i32>} : memref<8x1xf32, #tpu.memory_space<vmem>>, vector<8x1xf32>,
    %c0_i32_20 = arith.constant 0 : i32
    %34 = arith.cmpi eq, %arg1, %c0_i32_20 : i32
    %35 = arith.extui %34 : i1 to i32
    %c0_i32_21 = arith.constant 0 : i32
    %36 = arith.cmpi ne, %35, %c0_i32_21 : i32
    scf.if %36 {
      %c0_22 = arith.constant 0 : index
      %c0_23 = arith.constant 0 : index
      %37 = vector.load %arg6[%c0_22, %c0_23] : memref<8x1xf32, #tpu.memory_space<vmem>>, vector<8x1xf32>
      %38 = tpu.reciprocal %37 {approx = true} : vector<8x1xf32> -> vector<8x1xf32>
      %c0_24 = arith.constant 0 : index
      %c0_25 = arith.constant 0 : index
      %39 = vector.load %arg7[%c0_24, %c0_25] : memref<8x64xf32, #tpu.memory_space<vmem>>, vector<8x64xf32>
      %40 = vector.broadcast %38 : vector<8x1xf32> to vector<8x64xf32>
      %41 = arith.mulf %39, %40 : vector<8x64xf32>
      %c0_26 = arith.constant 0 : index
      %c0_27 = arith.constant 0 : index
      %42 = vector.load %arg4[%c0_26, %c0_27] : memref<8x64xf32, #tpu.memory_space<vmem>>, vector<8x64xf32>
      tpu.vector_store %arg4[%c0_26, %c0_27], %41 {strides = array<i32>} : memref<8x64xf32, #tpu.memory_space<vmem>>, vector<8x64xf32>,
    } else {
    }
    return
  }
  func.func @transform_0(%arg0: i32, %arg1: i32) -> (i32, i32, i32) {
    %c0_i32 = arith.constant 0 : i32
    %c0_i32_0 = arith.constant 0 : i32
    return %arg0, %arg1, %c0_i32 : i32, i32, i32
  }
  func.func @transform_1(%arg0: i32, %arg1: i32) -> (i32, i32) {
    %c0_i32 = arith.constant 0 : i32
    %c0_i32_0 = arith.constant 0 : i32
    return %arg0, %c0_i32 : i32, i32
  }
  func.func @transform_2(%arg0: i32, %arg1: i32) -> (i32, i32) {
    %c0_i32 = arith.constant 0 : i32
    %c0_i32_0 = arith.constant 0 : i32
    return %arg0, %c0_i32 : i32, i32
  }
}

</mosaic_0001>

<llo_original>
// kernel: tpu_custom_call.1
$region0: #{tpu_custom_call.1}
  #allocation0 [shape = 'u32[]', space=smem, size = 0x4, offset = 0x4, fixed_abs, tag = 'smem constant byte address 0x4 - core index']
  #allocation1 [shape = 'u32[144,128]{1,0:T(1,128)}', space=vmem, size = 0x12000, scoped, tag = 'internal scratch']
  #allocation2 [shape = 'f32[8,1]{1,0:T(8,128)}', space=vmem, size = 0x1000, scoped, tag = 'scratch operand']
  #allocation3 [shape = 'f32[8,1]{1,0:T(8,128)}', space=vmem, size = 0x1000, scoped, tag = 'scratch operand']
  #allocation4 [shape = 'f32[8,64]{1,0:T(8,128)}', space=vmem, size = 0x1000, scoped, tag = 'scratch operand']
  %s0 = inlined_call_operand.hbm [shape: f32[4,16,64], index: 0, kind: input, shape index: {}]
  %s1 = inlined_call_operand.hbm [shape: f32[4,64], index: 1, kind: input, shape index: {}]
  %s2 = inlined_call_operand.hbm [shape: f32[4,64], index: 2, kind: output, shape index: {}]
  %s3 = sld [smem:[#allocation0]]
  $region34: #{tpu_custom_call.1} parent=0
    _
  %s5 = ssub.s32 1, %s3
  %s6 = scalar_select 0, %s5, %s3
  $region1: #{tpu_custom_call.1} parent=0
    #allocation5 [shape = 'u8[65536]{0}', space=vmem, size = 0x10000, scoped, tag = 'input window, operand 0, single buffered']
    #allocation6 [shape = 's32[1]{0}', space=sflag, size = 0x4, scoped, tag = 'scoped memory for tpu_custom_call.1']
    #allocation7 [shape = 's32[1]{0}', space=sflag, size = 0x4, scoped, tag = 'scoped memory for tpu_custom_call.1']
    #allocation8 [shape = 'u8[4096]{0}', space=vmem, size = 0x1000, scoped, tag = 'input window, operand 1, single buffered']
    #allocation9 [shape = 's32[1]{0}', space=sflag, size = 0x4, scoped, tag = 'scoped memory for tpu_custom_call.1']
    #allocation10 [shape = 'u8[4096]{0}', space=vmem, size = 0x1000, scoped, tag = 'output window, operand 0, single buffered']
    %7 = vsyncpa [#allocation6], 0
    %8 = vsyncpa [#allocation9], 0
    %9 = vsyncpa [#allocation7], 0
    // Predicated region
    $region2: #{tpu_custom_call.1} parent=1 // pred_check
      _
    $region3: #{tpu_custom_call.1} parent=1 // pred_check_branch
      %11 = sbr.rel (0) target = $region5
    $region4: #{tpu_custom_call.1} parent=1 // pred_region
      %s13 = ssub.s32 2048, 1024
      %14 = vsyncadd [#allocation6], %s13
      %s15 = sshll.u32 [#allocation5], 4
      %s16 = int_to_ptr.vmem [resolvable:$true] %s15
      %21 = dma.hbm_to_vmem [thread:$0]  %s0, 1024, %s16, [#allocation6], 128, 128, 8
    $region5: #{tpu_custom_call.1} parent=1 // pred_fallthru
      _
    // Predicated region
    $region6: #{tpu_custom_call.1} parent=1 // pred_check
      _
    $region7: #{tpu_custom_call.1} parent=1 // pred_check_branch
      %23 = sbr.rel (0) target = $region9
    $region8: #{tpu_custom_call.1} parent=1 // pred_region
      %s25 = ssub.s32 128, 64
      %26 = vsyncadd [#allocation9], %s25
      %s27 = sshll.u32 [#allocation8], 4
      %s28 = int_to_ptr.vmem [resolvable:$true] %s27
      %33 = dma.hbm_to_vmem [thread:$0]  %s1, 64, %s28, [#allocation9], 64, 64, 4
    $region9: #{tpu_custom_call.1} parent=1 // pred_fallthru
      _
    // Predicated region
    $region10: #{tpu_custom_call.1} parent=1 // pred_check
      _
    $region11: #{tpu_custom_call.1} parent=1 // pred_check_branch
      %35 = sbr.rel (0) target = $region13
    $region12: #{tpu_custom_call.1} parent=1 // pred_region
      %36 = dma.done [#allocation6], 2048
    $region13: #{tpu_custom_call.1} parent=1 // pred_fallthru
      _
    // Predicated region
    $region14: #{tpu_custom_call.1} parent=1 // pred_check
      _
    $region15: #{tpu_custom_call.1} parent=1 // pred_check_branch
      %38 = sbr.rel (0) target = $region17
    $region16: #{tpu_custom_call.1} parent=1 // pred_region
      %39 = dma.done [#allocation9], 128
    $region17: #{tpu_custom_call.1} parent=1 // pred_fallthru
      _
    %p40 = scmp.eq.s32.totalorder 0, 0
    // Predicated region
    $region18: #{tpu_custom_call.1} parent=1 // pred_check
      %p41 = pneg %p40
    $region19: #{tpu_custom_call.1} parent=1 // pred_check_branch
      %43 = sbr.rel (%p41) target = $region21
    $region20: #{tpu_custom_call.1} parent=1 // pred_region
      %vm44 = vcmask 7168
      %45 = vst.msk [vmem:[#allocation2] sm:$0xff] %vm44, -inf
      %46 = vst.msk [vmem:[#allocation3] sm:$0xff] %vm44, 0.0
      %vm47 = vcmask 523264
      %48 = vst.msk [vmem:[#allocation4] sm:$0xff] %vm47, 0.0
    $region21: #{tpu_custom_call.1} parent=1 // pred_fallthru
      _
    %v49 = vld [vmem:[#allocation5] sm:$0xff]
    %v50 = vld [vmem:[#allocation5 + $0x8] sm:$0xff]
    %v51 = vld [vmem:[#allocation5 + $0x10] sm:$0xff]
    %v52 = vld [vmem:[#allocation5 + $0x18] sm:$0xff]
    %v53 = vld [vmem:[#allocation5 + $0x20] sm:$0xff]
    %v54 = vld [vmem:[#allocation5 + $0x28] sm:$0xff]
    %v55 = vld [vmem:[#allocation5 + $0x30] sm:$0xff]
    %v56 = vld [vmem:[#allocation5 + $0x38] sm:$0xff]
    %v57 = vld [vmem:[#allocation5 + $0x40] sm:$0xff]
    %v58 = vld [vmem:[#allocation5 + $0x48] sm:$0xff]
    %v59 = vld [vmem:[#allocation5 + $0x50] sm:$0xff]
    %v60 = vld [vmem:[#allocation5 + $0x58] sm:$0xff]
    %v61 = vld [vmem:[#allocation5 + $0x60] sm:$0xff]
    %v62 = vld [vmem:[#allocation5 + $0x68] sm:$0xff]
    %v63 = vld [vmem:[#allocation5 + $0x70] sm:$0xff]
    %v64 = vld [vmem:[#allocation5 + $0x78] sm:$0xff]
    %v65 = vld [vmem:[#allocation8] sm:$0xff]
    %v67 = vcombine.high %v65, %v65
    %v69 = vunpack.c.l.s4 1966171168
    %v70 = vunpack.c.0.s8 %v69
    %v71 = vlaneseq
    %v72 = vshrl.u32 %v71, 7
    %v73 = vsub.s32 %v70, %v72
    %v74 = vrot.slane %v65, %v73
    %v76 = vunpack.c.l.s4 1966171168
    %v77 = vunpack.c.0.s8 %v76
    %v78 = vlaneseq
    %v79 = vshrl.u32 %v78, 7
    %v80 = vsub.s32 %v77, %v79
    %v81 = vrot.slane %v67, %v80
    %v82 = vcombine.high %v74, %v74
    %v83 = vcombine.high %v81, %v81
    %v85 = vunpack.c.l.s4 1966171168
    %v86 = vunpack.c.0.s8 %v85
    %v87 = vlaneseq
    %v88 = vshrl.u32 %v87, 7
    %v89 = vsub.s32 %v86, %v88
    %v90 = vrot.slane %v74, %v89
    %v92 = vunpack.c.l.s4 1966171168
    %v93 = vunpack.c.0.s8 %v92
    %v94 = vlaneseq
    %v95 = vshrl.u32 %v94, 7
    %v96 = vsub.s32 %v93, %v95
    %v97 = vrot.slane %v81, %v96
    %v99 = vunpack.c.l.s4 1966171168
    %v100 = vunpack.c.0.s8 %v99
    %v101 = vlaneseq
    %v102 = vshrl.u32 %v101, 7
    %v103 = vsub.s32 %v100, %v102
    %v104 = vrot.slane %v82, %v103
    %v106 = vunpack.c.l.s4 1966171168
    %v107 = vunpack.c.0.s8 %v106
    %v108 = vlaneseq
    %v109 = vshrl.u32 %v108, 7
    %v110 = vsub.s32 %v107, %v109
    %v111 = vrot.slane %v83, %v110
    %v112 = vcombine.high %v90, %v90
    %v113 = vcombine.high %v97, %v97
    %v114 = vcombine.high %v104, %v104
    %v115 = vcombine.high %v111, %v111
    %v116 = vlaneseq
    %v117 = vshrl.u32 %v116, 7
    %v118 = vsub.s32 0, %v117
    %v119 = vrot.slane %v90, %v118
    %v120 = vlaneseq
    %v121 = vshrl.u32 %v120, 7
    %v122 = vsub.s32 0, %v121
    %v123 = vrot.slane %v104, %v122
    %v124 = vlaneseq
    %v125 = vshrl.u32 %v124, 7
    %v126 = vsub.s32 0, %v125
    %v127 = vrot.slane %v112, %v126
    %v128 = vlaneseq
    %v129 = vshrl.u32 %v128, 7
    %v130 = vsub.s32 0, %v129
    %v131 = vrot.slane %v114, %v130
    %v132 = vlaneseq
    %v133 = vshrl.u32 %v132, 7
    %v134 = vsub.s32 0, %v133
    %v135 = vrot.slane %v97, %v134
    %v136 = vlaneseq
    %v137 = vshrl.u32 %v136, 7
    %v138 = vsub.s32 0, %v137
    %v139 = vrot.slane %v111, %v138
    %v140 = vlaneseq
    %v141 = vshrl.u32 %v140, 7
    %v142 = vsub.s32 0, %v141
    %v143 = vrot.slane %v113, %v142
    %v144 = vlaneseq
    %v145 = vshrl.u32 %v144, 7
    %v146 = vsub.s32 0, %v145
    %v147 = vrot.slane %v115, %v146
    %v156 = vmul.f32 %v49, %v119
    %v157 = vmul.f32 %v50, %v119
    %v158 = vmul.f32 %v51, %v123
    %v159 = vmul.f32 %v52, %v123
    %v160 = vmul.f32 %v53, %v127
    %v161 = vmul.f32 %v54, %v127
    %v162 = vmul.f32 %v55, %v131
    %v163 = vmul.f32 %v56, %v131
    %v164 = vmul.f32 %v57, %v135
    %v165 = vmul.f32 %v58, %v135
    %v166 = vmul.f32 %v59, %v139
    %v167 = vmul.f32 %v60, %v139
    %v168 = vmul.f32 %v61, %v143
    %v169 = vmul.f32 %v62, %v143
    %v170 = vmul.f32 %v63, %v147
    %v171 = vmul.f32 %v64, %v147
    %vm172 = vcmask 523264
    %v173 = vsel %vm172, %v156, 0.0
    %174 = vadd.xlane.f32.xlu0 %v173
    %v175 = vpop.xlane.xlu0 %174
    %v176 = vsel %vm172, %v157, 0.0
    %177 = vadd.xlane.f32.xlu0 %v176
    %v178 = vpop.xlane.xlu0 %177
    %v179 = vsel %vm172, %v158, 0.0
    %180 = vadd.xlane.f32.xlu0 %v179
    %v181 = vpop.xlane.xlu0 %180
    %v182 = vsel %vm172, %v159, 0.0
    %183 = vadd.xlane.f32.xlu0 %v182
    %v184 = vpop.xlane.xlu0 %183
    %v185 = vsel %vm172, %v160, 0.0
    %186 = vadd.xlane.f32.xlu0 %v185
    %v187 = vpop.xlane.xlu0 %186
    %v188 = vsel %vm172, %v161, 0.0
    %189 = vadd.xlane.f32.xlu0 %v188
    %v190 = vpop.xlane.xlu0 %189
    %v191 = vsel %vm172, %v162, 0.0
    %192 = vadd.xlane.f32.xlu0 %v191
    %v193 = vpop.xlane.xlu0 %192
    %v194 = vsel %vm172, %v163, 0.0
    %195 = vadd.xlane.f32.xlu0 %v194
    %v196 = vpop.xlane.xlu0 %195
    %v197 = vsel %vm172, %v164, 0.0
    %198 = vadd.xlane.f32.xlu0 %v197
    %v199 = vpop.xlane.xlu0 %198
    %v200 = vsel %vm172, %v165, 0.0
    %201 = vadd.xlane.f32.xlu0 %v200
    %v202 = vpop.xlane.xlu0 %201
    %v203 = vsel %vm172, %v166, 0.0
    %204 = vadd.xlane.f32.xlu0 %v203
    %v205 = vpop.xlane.xlu0 %204
    %v206 = vsel %vm172, %v167, 0.0
    %207 = vadd.xlane.f32.xlu0 %v206
    %v208 = vpop.xlane.xlu0 %207
    %v209 = vsel %vm172, %v168, 0.0
    %210 = vadd.xlane.f32.xlu0 %v209
    %v211 = vpop.xlane.xlu0 %210
    %v212 = vsel %vm172, %v169, 0.0
    %213 = vadd.xlane.f32.xlu0 %v212
    %v214 = vpop.xlane.xlu0 %213
    %v215 = vsel %vm172, %v170, 0.0
    %216 = vadd.xlane.f32.xlu0 %v215
    %v217 = vpop.xlane.xlu0 %216
    %v218 = vsel %vm172, %v171, 0.0
    %219 = vadd.xlane.f32.xlu0 %v218
    %v220 = vpop.xlane.xlu0 %219
    %v221 = vld [vmem:[#allocation2] sm:$0xff]
    %v238 = vlaneseq
    %v239 = vand.u32 %v238, 127
    %v240 = vlaneseq
    %v241 = vshrl.u32 %v240, 7
    %v242 = vsub.s32 %v239, %v241
    %v243 = vrot.slane %v175, %v242
    %v244 = vadd.s32 %v239, 4294967288
    %v245 = vlaneseq
    %v246 = vshrl.u32 %v245, 7
    %v247 = vsub.s32 %v244, %v246
    %v248 = vrot.slane %v178, %v247
    %vm249 = vcmask 130112
    %v250 = vsel %vm249, %v248, %v243
    %v251 = vlaneseq
    %v252 = vshrl.u32 %v251, 7
    %v253 = vsub.s32 %v239, %v252
    %v254 = vrot.slane %v181, %v253
    %v255 = vlaneseq
    %v256 = vshrl.u32 %v255, 7
    %v257 = vsub.s32 %v244, %v256
    %v258 = vrot.slane %v184, %v257
    %v259 = vsel %vm249, %v258, %v254
    %v260 = vlaneseq
    %v261 = vshrl.u32 %v260, 7
    %v262 = vsub.s32 %v239, %v261
    %v263 = vrot.slane %v187, %v262
    %v264 = vlaneseq
    %v265 = vshrl.u32 %v264, 7
    %v266 = vsub.s32 %v244, %v265
    %v267 = vrot.slane %v190, %v266
    %v268 = vsel %vm249, %v267, %v263
    %v269 = vlaneseq
    %v270 = vshrl.u32 %v269, 7
    %v271 = vsub.s32 %v239, %v270
    %v272 = vrot.slane %v193, %v271
    %v273 = vlaneseq
    %v274 = vshrl.u32 %v273, 7
    %v275 = vsub.s32 %v244, %v274
    %v276 = vrot.slane %v196, %v275
    %v277 = vsel %vm249, %v276, %v272
    %v278 = vlaneseq
    %v279 = vshrl.u32 %v278, 7
    %v280 = vsub.s32 %v239, %v279
    %v281 = vrot.slane %v199, %v280
    %v282 = vlaneseq
    %v283 = vshrl.u32 %v282, 7
    %v284 = vsub.s32 %v244, %v283
    %v285 = vrot.slane %v202, %v284
    %v286 = vsel %vm249, %v285, %v281
    %v287 = vlaneseq
    %v288 = vshrl.u32 %v287, 7
    %v289 = vsub.s32 %v239, %v288
    %v290 = vrot.slane %v205, %v289
    %v291 = vlaneseq
    %v292 = vshrl.u32 %v291, 7
    %v293 = vsub.s32 %v244, %v292
    %v294 = vrot.slane %v208, %v293
    %v295 = vsel %vm249, %v294, %v290
    %v296 = vlaneseq
    %v297 = vshrl.u32 %v296, 7
    %v298 = vsub.s32 %v239, %v297
    %v299 = vrot.slane %v211, %v298
    %v300 = vlaneseq
    %v301 = vshrl.u32 %v300, 7
    %v302 = vsub.s32 %v244, %v301
    %v303 = vrot.slane %v214, %v302
    %v304 = vsel %vm249, %v303, %v299
    %v305 = vlaneseq
    %v306 = vshrl.u32 %v305, 7
    %v307 = vsub.s32 %v239, %v306
    %v308 = vrot.slane %v217, %v307
    %v309 = vlaneseq
    %v310 = vshrl.u32 %v309, 7
    %v311 = vsub.s32 %v244, %v310
    %v312 = vrot.slane %v220, %v311
    %v313 = vsel %vm249, %v312, %v308
    %vm314 = vcmask 1041409
    %v315 = vsel %vm314, %v259, %v250
    %vm316 = vcmask 1042434
    %v317 = vsel %vm316, %v268, %v315
    %vm318 = vcmask 1043459
    %v319 = vsel %vm318, %v277, %v317
    %vm320 = vcmask 1044484
    %v321 = vsel %vm320, %v286, %v319
    %vm322 = vcmask 1045509
    %v323 = vsel %vm322, %v295, %v321
    %vm324 = vcmask 1046534
    %v325 = vsel %vm324, %v304, %v323
    %vm326 = vcmask 1047559
    %v327 = vsel %vm326, %v313, %v325
    %vm329 = vcmask 130048
    %v330 = vsel %vm329, %v327, -inf
    %331 = vmax.xlane.f32.xlu0 %v330
    %v332 = vpop.xlane.xlu0 %331
    %v333 = vmax.f32 %v221, %v332
    %v334 = vsub.f32 %v221, %v333
    %v335 = vmul.f32 %v334, 1.442695
    %v336 = vpow.pop %v335
    %338 = vset.pattern.permute.xlu0 0
    %339 = vperm.xlu0 %338, %v333
    %v340 = vpop.permute.xlu0 %339
    %v341 = vlaneseq
    %v342 = vshrl.u32 %v341, 7
    %v343 = vsub.s32 0, %v342
    %v344 = vrot.slane %v340, %v343
    %v345 = vlaneseq
    %v346 = vshrl.u32 %v345, 7
    %v347 = vsub.s32 1, %v346
    %v348 = vrot.slane %v340, %v347
    %v349 = vlaneseq
    %v350 = vshrl.u32 %v349, 7
    %v351 = vsub.s32 2, %v350
    %v352 = vrot.slane %v340, %v351
    %v353 = vlaneseq
    %v354 = vshrl.u32 %v353, 7
    %v355 = vsub.s32 3, %v354
    %v356 = vrot.slane %v340, %v355
    %v357 = vlaneseq
    %v358 = vshrl.u32 %v357, 7
    %v359 = vsub.s32 4, %v358
    %v360 = vrot.slane %v340, %v359
    %v361 = vlaneseq
    %v362 = vshrl.u32 %v361, 7
    %v363 = vsub.s32 5, %v362
    %v364 = vrot.slane %v340, %v363
    %v365 = vlaneseq
    %v366 = vshrl.u32 %v365, 7
    %v367 = vsub.s32 6, %v366
    %v368 = vrot.slane %v340, %v367
    %v369 = vlaneseq
    %v370 = vshrl.u32 %v369, 7
    %v371 = vsub.s32 7, %v370
    %v372 = vrot.slane %v340, %v371
    %v381 = vsub.f32 %v175, %v344
    %v382 = vsub.f32 %v178, %v344
    %v383 = vsub.f32 %v181, %v348
    %v384 = vsub.f32 %v184, %v348
    %v385 = vsub.f32 %v187, %v352
    %v386 = vsub.f32 %v190, %v352
    %v387 = vsub.f32 %v193, %v356
    %v388 = vsub.f32 %v196, %v356
    %v389 = vsub.f32 %v199, %v360
    %v390 = vsub.f32 %v202, %v360
    %v391 = vsub.f32 %v205, %v364
    %v392 = vsub.f32 %v208, %v364
    %v393 = vsub.f32 %v211, %v368
    %v394 = vsub.f32 %v214, %v368
    %v395 = vsub.f32 %v217, %v372
    %v396 = vsub.f32 %v220, %v372
    %v397 = vmul.f32 %v381, 1.442695
    %v398 = vpow.pop %v397
    %v399 = vmul.f32 %v382, 1.442695
    %v400 = vpow.pop %v399
    %v401 = vmul.f32 %v383, 1.442695
    %v402 = vpow.pop %v401
    %v403 = vmul.f32 %v384, 1.442695
    %v404 = vpow.pop %v403
    %v405 = vmul.f32 %v385, 1.442695
    %v406 = vpow.pop %v405
    %v407 = vmul.f32 %v386, 1.442695
    %v408 = vpow.pop %v407
    %v409 = vmul.f32 %v387, 1.442695
    %v410 = vpow.pop %v409
    %v411 = vmul.f32 %v388, 1.442695
    %v412 = vpow.pop %v411
    %v413 = vmul.f32 %v389, 1.442695
    %v414 = vpow.pop %v413
    %v415 = vmul.f32 %v390, 1.442695
    %v416 = vpow.pop %v415
    %v417 = vmul.f32 %v391, 1.442695
    %v418 = vpow.pop %v417
    %v419 = vmul.f32 %v392, 1.442695
    %v420 = vpow.pop %v419
    %v421 = vmul.f32 %v393, 1.442695
    %v422 = vpow.pop %v421
    %v423 = vmul.f32 %v394, 1.442695
    %v424 = vpow.pop %v423
    %v425 = vmul.f32 %v395, 1.442695
    %v426 = vpow.pop %v425
    %v427 = vmul.f32 %v396, 1.442695
    %v428 = vpow.pop %v427
    %v429 = vld [vmem:[#allocation3] sm:$0xff]
    %v430 = vmul.f32 %v336, %v429
    %447 = vset.pattern.permute.xlu0 0
    %448 = vperm.xlu0 %447, %v398
    %v449 = vpop.permute.xlu0 %448
    %450 = vset.pattern.permute.xlu0 0
    %451 = vperm.xlu0 %450, %v400
    %v452 = vpop.permute.xlu0 %451
    %453 = vset.pattern.permute.xlu0 0
    %454 = vperm.xlu0 %453, %v402
    %v455 = vpop.permute.xlu0 %454
    %456 = vset.pattern.permute.xlu0 0
    %457 = vperm.xlu0 %456, %v404
    %v458 = vpop.permute.xlu0 %457
    %459 = vset.pattern.permute.xlu0 0
    %460 = vperm.xlu0 %459, %v406
    %v461 = vpop.permute.xlu0 %460
    %462 = vset.pattern.permute.xlu0 0
    %463 = vperm.xlu0 %462, %v408
    %v464 = vpop.permute.xlu0 %463
    %465 = vset.pattern.permute.xlu0 0
    %466 = vperm.xlu0 %465, %v410
    %v467 = vpop.permute.xlu0 %466
    %468 = vset.pattern.permute.xlu0 0
    %469 = vperm.xlu0 %468, %v412
    %v470 = vpop.permute.xlu0 %469
    %471 = vset.pattern.permute.xlu0 0
    %472 = vperm.xlu0 %471, %v414
    %v473 = vpop.permute.xlu0 %472
    %474 = vset.pattern.permute.xlu0 0
    %475 = vperm.xlu0 %474, %v416
    %v476 = vpop.permute.xlu0 %475
    %477 = vset.pattern.permute.xlu0 0
    %478 = vperm.xlu0 %477, %v418
    %v479 = vpop.permute.xlu0 %478
    %480 = vset.pattern.permute.xlu0 0
    %481 = vperm.xlu0 %480, %v420
    %v482 = vpop.permute.xlu0 %481
    %483 = vset.pattern.permute.xlu0 0
    %484 = vperm.xlu0 %483, %v422
    %v485 = vpop.permute.xlu0 %484
    %486 = vset.pattern.permute.xlu0 0
    %487 = vperm.xlu0 %486, %v424
    %v488 = vpop.permute.xlu0 %487
    %489 = vset.pattern.permute.xlu0 0
    %490 = vperm.xlu0 %489, %v426
    %v491 = vpop.permute.xlu0 %490
    %492 = vset.pattern.permute.xlu0 0
    %493 = vperm.xlu0 %492, %v428
    %v494 = vpop.permute.xlu0 %493
    %v495 = vlaneseq
    %v496 = vshrl.u32 %v495, 7
    %v497 = vsub.s32 %v239, %v496
    %v498 = vrot.slane %v449, %v497
    %v499 = vlaneseq
    %v500 = vshrl.u32 %v499, 7
    %v501 = vsub.s32 %v244, %v500
    %v502 = vrot.slane %v452, %v501
    %v503 = vsel %vm249, %v502, %v498
    %v504 = vlaneseq
    %v505 = vshrl.u32 %v504, 7
    %v506 = vsub.s32 %v239, %v505
    %v507 = vrot.slane %v455, %v506
    %v508 = vlaneseq
    %v509 = vshrl.u32 %v508, 7
    %v510 = vsub.s32 %v244, %v509
    %v511 = vrot.slane %v458, %v510
    %v512 = vsel %vm249, %v511, %v507
    %v513 = vlaneseq
    %v514 = vshrl.u32 %v513, 7
    %v515 = vsub.s32 %v239, %v514
    %v516 = vrot.slane %v461, %v515
    %v517 = vlaneseq
    %v518 = vshrl.u32 %v517, 7
    %v519 = vsub.s32 %v244, %v518
    %v520 = vrot.slane %v464, %v519
    %v521 = vsel %vm249, %v520, %v516
    %v522 = vlaneseq
    %v523 = vshrl.u32 %v522, 7
    %v524 = vsub.s32 %v239, %v523
    %v525 = vrot.slane %v467, %v524
    %v526 = vlaneseq
    %v527 = vshrl.u32 %v526, 7
    %v528 = vsub.s32 %v244, %v527
    %v529 = vrot.slane %v470, %v528
    %v530 = vsel %vm249, %v529, %v525
    %v531 = vlaneseq
    %v532 = vshrl.u32 %v531, 7
    %v533 = vsub.s32 %v239, %v532
    %v534 = vrot.slane %v473, %v533
    %v535 = vlaneseq
    %v536 = vshrl.u32 %v535, 7
    %v537 = vsub.s32 %v244, %v536
    %v538 = vrot.slane %v476, %v537
    %v539 = vsel %vm249, %v538, %v534
    %v540 = vlaneseq
    %v541 = vshrl.u32 %v540, 7
    %v542 = vsub.s32 %v239, %v541
    %v543 = vrot.slane %v479, %v542
    %v544 = vlaneseq
    %v545 = vshrl.u32 %v544, 7
    %v546 = vsub.s32 %v244, %v545
    %v547 = vrot.slane %v482, %v546
    %v548 = vsel %vm249, %v547, %v543
    %v549 = vlaneseq
    %v550 = vshrl.u32 %v549, 7
    %v551 = vsub.s32 %v239, %v550
    %v552 = vrot.slane %v485, %v551
    %v553 = vlaneseq
    %v554 = vshrl.u32 %v553, 7
    %v555 = vsub.s32 %v244, %v554
    %v556 = vrot.slane %v488, %v555
    %v557 = vsel %vm249, %v556, %v552
    %v558 = vlaneseq
    %v559 = vshrl.u32 %v558, 7
    %v560 = vsub.s32 %v239, %v559
    %v561 = vrot.slane %v491, %v560
    %v562 = vlaneseq
    %v563 = vshrl.u32 %v562, 7
    %v564 = vsub.s32 %v244, %v563
    %v565 = vrot.slane %v494, %v564
    %v566 = vsel %vm249, %v565, %v561
    %v567 = vsel %vm314, %v512, %v503
    %v568 = vsel %vm316, %v521, %v567
    %v569 = vsel %vm318, %v530, %v568
    %v570 = vsel %vm320, %v539, %v569
    %v571 = vsel %vm322, %v548, %v570
    %v572 = vsel %vm324, %v557, %v571
    %v573 = vsel %vm326, %v566, %v572
    %v575 = vsel %vm329, %v573, 0.0
    %576 = vadd.xlane.f32.xlu0 %v575
    %v577 = vpop.xlane.xlu0 %576
    %v578 = vadd.f32 %v430, %v577
    %vm579 = vcmask 7168
    %580 = vst.msk [vmem:[#allocation3] sm:$0xff] %vm579, %v578
    %v581 = vld [vmem:[#allocation4] sm:$0xff]
    %583 = vset.pattern.permute.xlu0 0
    %584 = vperm.xlu0 %583, %v336
    %v585 = vpop.permute.xlu0 %584
    %v587 = vmul.f32 %v585, %v581
    %v604 = vmul.f32 %v49, %v449
    %v605 = vmul.f32 %v50, %v452
    %v606 = vmul.f32 %v51, %v455
    %v607 = vmul.f32 %v52, %v458
    %v608 = vmul.f32 %v53, %v461
    %v609 = vmul.f32 %v54, %v464
    %v610 = vmul.f32 %v55, %v467
    %v611 = vmul.f32 %v56, %v470
    %v612 = vmul.f32 %v57, %v473
    %v613 = vmul.f32 %v58, %v476
    %v614 = vmul.f32 %v59, %v479
    %v615 = vmul.f32 %v60, %v482
    %v616 = vmul.f32 %v61, %v485
    %v617 = vmul.f32 %v62, %v488
    %v618 = vmul.f32 %v63, %v491
    %v619 = vmul.f32 %v64, %v494
    %v620 = vsel %vm172, %v604, 0.0
    %v621 = vsel %vm172, %v605, 0.0
    %v622 = vadd.f32 %v620, %v621
    %v623 = vrot.slane %v622, 4
    %v624 = vadd.f32 %v622, %v623
    %v625 = vrot.slane %v624, 2
    %v626 = vadd.f32 %v624, %v625
    %v627 = vrot.slane %v626, 1
    %v628 = vadd.f32 %v626, %v627
    %v629 = vsel %vm172, %v606, 0.0
    %v630 = vsel %vm172, %v607, 0.0
    %v631 = vadd.f32 %v629, %v630
    %v632 = vrot.slane %v631, 4
    %v633 = vadd.f32 %v631, %v632
    %v634 = vrot.slane %v633, 2
    %v635 = vadd.f32 %v633, %v634
    %v636 = vrot.slane %v635, 1
    %v637 = vadd.f32 %v635, %v636
    %v638 = vsel %vm172, %v608, 0.0
    %v639 = vsel %vm172, %v609, 0.0
    %v640 = vadd.f32 %v638, %v639
    %v641 = vrot.slane %v640, 4
    %v642 = vadd.f32 %v640, %v641
    %v643 = vrot.slane %v642, 2
    %v644 = vadd.f32 %v642, %v643
    %v645 = vrot.slane %v644, 1
    %v646 = vadd.f32 %v644, %v645
    %v647 = vsel %vm172, %v610, 0.0
    %v648 = vsel %vm172, %v611, 0.0
    %v649 = vadd.f32 %v647, %v648
    %v650 = vrot.slane %v649, 4
    %v651 = vadd.f32 %v649, %v650
    %v652 = vrot.slane %v651, 2
    %v653 = vadd.f32 %v651, %v652
    %v654 = vrot.slane %v653, 1
    %v655 = vadd.f32 %v653, %v654
    %v656 = vsel %vm172, %v612, 0.0
    %v657 = vsel %vm172, %v613, 0.0
    %v658 = vadd.f32 %v656, %v657
    %v659 = vrot.slane %v658, 4
    %v660 = vadd.f32 %v658, %v659
    %v661 = vrot.slane %v660, 2
    %v662 = vadd.f32 %v660, %v661
    %v663 = vrot.slane %v662, 1
    %v664 = vadd.f32 %v662, %v663
    %v665 = vsel %vm172, %v614, 0.0
    %v666 = vsel %vm172, %v615, 0.0
    %v667 = vadd.f32 %v665, %v666
    %v668 = vrot.slane %v667, 4
    %v669 = vadd.f32 %v667, %v668
    %v670 = vrot.slane %v669, 2
    %v671 = vadd.f32 %v669, %v670
    %v672 = vrot.slane %v671, 1
    %v673 = vadd.f32 %v671, %v672
    %v674 = vsel %vm172, %v616, 0.0
    %v675 = vsel %vm172, %v617, 0.0
    %v676 = vadd.f32 %v674, %v675
    %v677 = vrot.slane %v676, 4
    %v678 = vadd.f32 %v676, %v677
    %v679 = vrot.slane %v678, 2
    %v680 = vadd.f32 %v678, %v679
    %v681 = vrot.slane %v680, 1
    %v682 = vadd.f32 %v680, %v681
    %v683 = vsel %vm172, %v618, 0.0
    %v684 = vsel %vm172, %v619, 0.0
    %v685 = vadd.f32 %v683, %v684
    %v686 = vrot.slane %v685, 4
    %v687 = vadd.f32 %v685, %v686
    %v688 = vrot.slane %v687, 2
    %v689 = vadd.f32 %v687, %v688
    %v690 = vrot.slane %v689, 1
    %v691 = vadd.f32 %v689, %v690
    %v700 = vsel %vm314, %v637, %v628
    %v701 = vsel %vm316, %v646, %v700
    %v702 = vsel %vm318, %v655, %v701
    %v703 = vsel %vm320, %v664, %v702
    %v704 = vsel %vm322, %v673, %v703
    %v705 = vsel %vm324, %v682, %v704
    %v706 = vsel %vm326, %v691, %v705
    %v708 = vadd.f32 %v587, %v706
    %709 = vst.msk [vmem:[#allocation4] sm:$0xff] %vm172, %v708
    %710 = vst.msk [vmem:[#allocation2] sm:$0xff] %vm579, %v333
    // Predicated region
    $region22: #{tpu_custom_call.1} parent=1 // pred_check
      %p711 = pneg %p40
    $region23: #{tpu_custom_call.1} parent=1 // pred_check_branch
      %713 = sbr.rel (%p711) target = $region25
    $region24: #{tpu_custom_call.1} parent=1 // pred_region
      %v714 = vld [vmem:[#allocation3] sm:$0xff]
      %v715 = vrcp.pop %v714
      %v716 = vld [vmem:[#allocation4] sm:$0xff]
      %718 = vset.pattern.permute.xlu0 0
      %719 = vperm.xlu0 %718, %v715
      %v720 = vpop.permute.xlu0 %719
      %v722 = vmul.f32 %v716, %v720
      %723 = vst.msk [vmem:[#allocation10] sm:$0xff] %vm172, %v722
    $region25: #{tpu_custom_call.1} parent=1 // pred_fallthru
      _
    // Predicated region
    $region26: #{tpu_custom_call.1} parent=1 // pred_check
      _
    $region27: #{tpu_custom_call.1} parent=1 // pred_check_branch
      %725 = sbr.rel (0) target = $region29
    $region28: #{tpu_custom_call.1} parent=1 // pred_region
      %s727 = ssub.s32 128, 64
      %728 = vsyncadd [#allocation7], %s727
      %s729 = sshll.u32 [#allocation10], 4
      %s730 = int_to_ptr.vmem [resolvable:$true] %s729
      %735 = dma.vmem_to_hbm [thread:$0]  %s730, 64, %s2, [#allocation7], 64, 64, 4
    $region29: #{tpu_custom_call.1} parent=1 // pred_fallthru
      _
    // Predicated region
    $region30: #{tpu_custom_call.1} parent=1 // pred_check
      _
    $region31: #{tpu_custom_call.1} parent=1 // pred_check_branch
      %737 = sbr.rel (0) target = $region33
    $region32: #{tpu_custom_call.1} parent=1 // pred_region
      %738 = dma.done [#allocation7], 128
    $region33: #{tpu_custom_call.1} parent=1 // pred_fallthru
      _
    %739 = vsyncpa [#allocation6], 1
    %740 = vsyncpa [#allocation9], 1
    %741 = vsyncpa [#allocation7], 1

</llo_original>
